<compile_context>
chip_gen: v5e
topology: v5e:2x2
jax: 0.10.0
libtpu: 0.0.40
codegen_flags: <defaults>
</compile_context>

<pallas_src>
import jax
import jax.numpy as jnp
from jax.experimental import pallas as pl
from jax.experimental.pallas import tpu as pltpu

_FEATURES = 3
_LANES = 128


def _toy_shared_linear_kernel(p_ref, x_ref, o_ref):
    """Shared Linear(3,3) applied three times.

    p_ref: SMEM (12,) f32  -- W in torch (out, in) row-major order [0..8],
                              bias [9..11].
    x_ref, o_ref: VMEM (3, rows, 128) f32 -- features on axis 0, batch spread
                              over (sublanes, lanes) so vregs are fully dense.
    """
    # Hoisted: read all 12 parameters from SMEM exactly once, outside the
    # per-layer body (nothing parameter-related is re-emitted per layer).
    w00, w01, w02 = p_ref[0], p_ref[1], p_ref[2]
    w10, w11, w12 = p_ref[3], p_ref[4], p_ref[5]
    w20, w21, w22 = p_ref[6], p_ref[7], p_ref[8]
    b0, b1, b2 = p_ref[9], p_ref[10], p_ref[11]

    h0 = x_ref[0]          # (rows, 128)
    h1 = x_ref[1]
    h2 = x_ref[2]

    def linear(a0, a1, a2):
        # out_j = sum_k W[j, k] * x_k + b_j   (x @ W^T + b, torch semantics)
        # VPU FMAs with scalar operands; MXU deliberately avoided (K=N=3).
        o0 = w00 * a0 + w01 * a1 + w02 * a2 + b0
        o1 = w10 * a0 + w11 * a1 + w12 * a2 + b1
        o2 = w20 * a0 + w21 * a1 + w22 * a2 + b2
        return o0, o1, o2

    # The same layer (same W, b) applied three times -- non-unique layers.
    h0, h1, h2 = linear(h0, h1, h2)
    h0, h1, h2 = linear(h0, h1, h2)
    h0, h1, h2 = linear(h0, h1, h2)

    o_ref[0] = h0
    o_ref[1] = h1
    o_ref[2] = h2


def toy_model_no_unique_layers(x, weight, bias, *, rows_per_block=256):
    """x: (B, 3) f32; weight: (3, 3) torch layout (out, in); bias: (3,)."""
    B, F = x.shape
    if F != _FEATURES:
        raise ValueError(f"ToyModelNoUniqueLayers expects {_FEATURES} features, got {F}")

    params = jnp.concatenate(
        [jnp.asarray(weight, jnp.float32).reshape(-1),
         jnp.asarray(bias, jnp.float32).reshape(-1)])            # (12,) -> SMEM

    # Lane-dense layout: batch -> (sublane rows, 128 lanes).
    rows = pl.cdiv(B, _LANES)
    if rows <= rows_per_block:
        rb, nb = rows, 1            # single block == full array extent (legal)
    else:
        rb = rows_per_block         # multiple of 8 -> satisfies (8, 128) rule
        nb = pl.cdiv(rows, rb)
    rows = nb * rb
    padded_b = rows * _LANES

    xT = jnp.transpose(x.astype(jnp.float32))                    # (3, B)
    if padded_b != B:
        xT = jnp.pad(xT, ((0, 0), (0, padded_b - B)))
    x3 = xT.reshape(_FEATURES, rows, _LANES)

    # Per-step block: 3*256*128*4 B = 384 KiB in + out, double-buffered ~1.5 MiB:
    # comfortably inside the default scoped VMEM on v5e/v6e (32/128 MiB) and
    # v7x (32/64 MiB), so no vmem_limit_bytes override is needed.
    out3 = pl.pallas_call(
        _toy_shared_linear_kernel,
        out_shape=jax.ShapeDtypeStruct((_FEATURES, rows, _LANES), jnp.float32),
        grid=(nb,),
        in_specs=[
            # 48-byte param slab in SMEM: drops the second VMEM DMA entirely.
            pl.BlockSpec(memory_space=pltpu.MemorySpace.SMEM),
            pl.BlockSpec((_FEATURES, rb, _LANES), lambda i: (0, i, 0)),
        ],
        out_specs=pl.BlockSpec((_FEATURES, rb, _LANES), lambda i: (0, i, 0)),
        compiler_params=pltpu.CompilerParams(
            # Batch axis is embarrassingly parallel: splits across the two
            # TensorCores on v7x; harmless no-op on v5e/v6e (1 TC).
            dimension_semantics=("parallel",),
        ),
    )(params, x3)

    outT = out3.reshape(_FEATURES, padded_b)[:, :B]               # drop padding
    return jnp.transpose(outT)                                    # (B, 3)


if __name__ == "__main__":
    key = jax.random.PRNGKey(0)
    kw, kb, kx = jax.random.split(key, 3)

    # torch.nn.Linear(3, 3) default init: U(-1/sqrt(in), 1/sqrt(in)), fp32.
    bound = 1.0 / jnp.sqrt(jnp.float32(_FEATURES))
    weight = jax.random.uniform(kw, (_FEATURES, _FEATURES), jnp.float32,
                                -bound, bound)                    # (out, in)
    bias = jax.random.uniform(kb, (_FEATURES,), jnp.float32, -bound, bound)

    # Small batch consistent with the module's 3-feature Linear.
    x = jax.random.normal(kx, (8, _FEATURES), jnp.float32)

    out = jax.block_until_ready(toy_model_no_unique_layers(x, weight, bias))

    # Pure-JAX reference: the single shared Linear applied three times.
    ref = x
    for _ in range(3):
        ref = ref @ weight.T + bias

    assert out.shape == x.shape and out.dtype == jnp.float32
    assert jnp.allclose(out, ref, atol=1e-5, rtol=1e-5)

    print("KERNEL_OK")
</pallas_src>

<mosaic_0001>
module attributes {stable_mosaic.version = 11 : i64} {
  func.func @_toy_shared_linear_kernel(%arg0: i32, %arg1: memref<12xf32, #tpu.memory_space<smem>>, %arg2: memref<3x1x128xf32, #tpu.memory_space<vmem>>, %arg3: memref<3x1x128xf32, #tpu.memory_space<vmem>>) attributes {dimension_semantics = [#tpu.dimension_semantics<parallel>], iteration_bounds = array<i64: 1>, scalar_prefetch = 0 : i64, scratch_operands = 0 : i64, tpu.core_type = #tpu.core_type<tc>, window_params = [{transform_indices = @transform_0, window_bounds = array<i64: 12>}, {transform_indices = @transform_1, window_bounds = array<i64: 3, 1, 128>}, {transform_indices = @transform_2, window_bounds = array<i64: 3, 1, 128>}]} {
    %c0 = arith.constant 0 : index
    %0 = memref.load %arg1[%c0] : memref<12xf32, #tpu.memory_space<smem>>
    %c1 = arith.constant 1 : index
    %1 = memref.load %arg1[%c1] : memref<12xf32, #tpu.memory_space<smem>>
    %c2 = arith.constant 2 : index
    %2 = memref.load %arg1[%c2] : memref<12xf32, #tpu.memory_space<smem>>
    %c3 = arith.constant 3 : index
    %3 = memref.load %arg1[%c3] : memref<12xf32, #tpu.memory_space<smem>>
    %c4 = arith.constant 4 : index
    %4 = memref.load %arg1[%c4] : memref<12xf32, #tpu.memory_space<smem>>
    %c5 = arith.constant 5 : index
    %5 = memref.load %arg1[%c5] : memref<12xf32, #tpu.memory_space<smem>>
    %c6 = arith.constant 6 : index
    %6 = memref.load %arg1[%c6] : memref<12xf32, #tpu.memory_space<smem>>
    %c7 = arith.constant 7 : index
    %7 = memref.load %arg1[%c7] : memref<12xf32, #tpu.memory_space<smem>>
    %c8 = arith.constant 8 : index
    %8 = memref.load %arg1[%c8] : memref<12xf32, #tpu.memory_space<smem>>
    %c9 = arith.constant 9 : index
    %9 = memref.load %arg1[%c9] : memref<12xf32, #tpu.memory_space<smem>>
    %c10 = arith.constant 10 : index
    %10 = memref.load %arg1[%c10] : memref<12xf32, #tpu.memory_space<smem>>
    %c11 = arith.constant 11 : index
    %11 = memref.load %arg1[%c11] : memref<12xf32, #tpu.memory_space<smem>>
    %c0_0 = arith.constant 0 : index
    %c0_1 = arith.constant 0 : index
    %c0_2 = arith.constant 0 : index
    %12 = vector.load %arg2[%c0_0, %c0_1, %c0_2] : memref<3x1x128xf32, #tpu.memory_space<vmem>>, vector<1x1x128xf32>
    %13 = vector.shape_cast %12 : vector<1x1x128xf32> to vector<1x128xf32>
    %c1_3 = arith.constant 1 : index
    %c0_4 = arith.constant 0 : index
    %c0_5 = arith.constant 0 : index
    %14 = vector.load %arg2[%c1_3, %c0_4, %c0_5] : memref<3x1x128xf32, #tpu.memory_space<vmem>>, vector<1x1x128xf32>
    %15 = vector.shape_cast %14 : vector<1x1x128xf32> to vector<1x128xf32>
    %c2_6 = arith.constant 2 : index
    %c0_7 = arith.constant 0 : index
    %c0_8 = arith.constant 0 : index
    %16 = vector.load %arg2[%c2_6, %c0_7, %c0_8] : memref<3x1x128xf32, #tpu.memory_space<vmem>>, vector<1x1x128xf32>
    %17 = vector.shape_cast %16 : vector<1x1x128xf32> to vector<1x128xf32>
    %18 = vector.broadcast %0 : f32 to vector<1x128xf32>
    %19 = arith.mulf %18, %13 : vector<1x128xf32>
    %20 = vector.broadcast %1 : f32 to vector<1x128xf32>
    %21 = arith.mulf %20, %15 : vector<1x128xf32>
    %22 = arith.addf %19, %21 : vector<1x128xf32>
    %23 = vector.broadcast %2 : f32 to vector<1x128xf32>
    %24 = arith.mulf %23, %17 : vector<1x128xf32>
    %25 = arith.addf %22, %24 : vector<1x128xf32>
    %26 = vector.broadcast %9 : f32 to vector<1x128xf32>
    %27 = arith.addf %25, %26 : vector<1x128xf32>
    %28 = vector.broadcast %3 : f32 to vector<1x128xf32>
    %29 = arith.mulf %28, %13 : vector<1x128xf32>
    %30 = vector.broadcast %4 : f32 to vector<1x128xf32>
    %31 = arith.mulf %30, %15 : vector<1x128xf32>
    %32 = arith.addf %29, %31 : vector<1x128xf32>
    %33 = vector.broadcast %5 : f32 to vector<1x128xf32>
    %34 = arith.mulf %33, %17 : vector<1x128xf32>
    %35 = arith.addf %32, %34 : vector<1x128xf32>
    %36 = vector.broadcast %10 : f32 to vector<1x128xf32>
    %37 = arith.addf %35, %36 : vector<1x128xf32>
    %38 = vector.broadcast %6 : f32 to vector<1x128xf32>
    %39 = arith.mulf %38, %13 : vector<1x128xf32>
    %40 = vector.broadcast %7 : f32 to vector<1x128xf32>
    %41 = arith.mulf %40, %15 : vector<1x128xf32>
    %42 = arith.addf %39, %41 : vector<1x128xf32>
    %43 = vector.broadcast %8 : f32 to vector<1x128xf32>
    %44 = arith.mulf %43, %17 : vector<1x128xf32>
    %45 = arith.addf %42, %44 : vector<1x128xf32>
    %46 = vector.broadcast %11 : f32 to vector<1x128xf32>
    %47 = arith.addf %45, %46 : vector<1x128xf32>
    %48 = vector.broadcast %0 : f32 to vector<1x128xf32>
    %49 = arith.mulf %48, %27 : vector<1x128xf32>
    %50 = vector.broadcast %1 : f32 to vector<1x128xf32>
    %51 = arith.mulf %50, %37 : vector<1x128xf32>
    %52 = arith.addf %49, %51 : vector<1x128xf32>
    %53 = vector.broadcast %2 : f32 to vector<1x128xf32>
    %54 = arith.mulf %53, %47 : vector<1x128xf32>
    %55 = arith.addf %52, %54 : vector<1x128xf32>
    %56 = vector.broadcast %9 : f32 to vector<1x128xf32>
    %57 = arith.addf %55, %56 : vector<1x128xf32>
    %58 = vector.broadcast %3 : f32 to vector<1x128xf32>
    %59 = arith.mulf %58, %27 : vector<1x128xf32>
    %60 = vector.broadcast %4 : f32 to vector<1x128xf32>
    %61 = arith.mulf %60, %37 : vector<1x128xf32>
    %62 = arith.addf %59, %61 : vector<1x128xf32>
    %63 = vector.broadcast %5 : f32 to vector<1x128xf32>
    %64 = arith.mulf %63, %47 : vector<1x128xf32>
    %65 = arith.addf %62, %64 : vector<1x128xf32>
    %66 = vector.broadcast %10 : f32 to vector<1x128xf32>
    %67 = arith.addf %65, %66 : vector<1x128xf32>
    %68 = vector.broadcast %6 : f32 to vector<1x128xf32>
    %69 = arith.mulf %68, %27 : vector<1x128xf32>
    %70 = vector.broadcast %7 : f32 to vector<1x128xf32>
    %71 = arith.mulf %70, %37 : vector<1x128xf32>
    %72 = arith.addf %69, %71 : vector<1x128xf32>
    %73 = vector.broadcast %8 : f32 to vector<1x128xf32>
    %74 = arith.mulf %73, %47 : vector<1x128xf32>
    %75 = arith.addf %72, %74 : vector<1x128xf32>
    %76 = vector.broadcast %11 : f32 to vector<1x128xf32>
    %77 = arith.addf %75, %76 : vector<1x128xf32>
    %78 = vector.broadcast %0 : f32 to vector<1x128xf32>
    %79 = arith.mulf %78, %57 : vector<1x128xf32>
    %80 = vector.broadcast %1 : f32 to vector<1x128xf32>
    %81 = arith.mulf %80, %67 : vector<1x128xf32>
    %82 = arith.addf %79, %81 : vector<1x128xf32>
    %83 = vector.broadcast %2 : f32 to vector<1x128xf32>
    %84 = arith.mulf %83, %77 : vector<1x128xf32>
    %85 = arith.addf %82, %84 : vector<1x128xf32>
    %86 = vector.broadcast %9 : f32 to vector<1x128xf32>
    %87 = arith.addf %85, %86 : vector<1x128xf32>
    %88 = vector.broadcast %3 : f32 to vector<1x128xf32>
    %89 = arith.mulf %88, %57 : vector<1x128xf32>
    %90 = vector.broadcast %4 : f32 to vector<1x128xf32>
    %91 = arith.mulf %90, %67 : vector<1x128xf32>
    %92 = arith.addf %89, %91 : vector<1x128xf32>
    %93 = vector.broadcast %5 : f32 to vector<1x128xf32>
    %94 = arith.mulf %93, %77 : vector<1x128xf32>
    %95 = arith.addf %92, %94 : vector<1x128xf32>
    %96 = vector.broadcast %10 : f32 to vector<1x128xf32>
    %97 = arith.addf %95, %96 : vector<1x128xf32>
    %98 = vector.broadcast %6 : f32 to vector<1x128xf32>
    %99 = arith.mulf %98, %57 : vector<1x128xf32>
    %100 = vector.broadcast %7 : f32 to vector<1x128xf32>
    %101 = arith.mulf %100, %67 : vector<1x128xf32>
    %102 = arith.addf %99, %101 : vector<1x128xf32>
    %103 = vector.broadcast %8 : f32 to vector<1x128xf32>
    %104 = arith.mulf %103, %77 : vector<1x128xf32>
    %105 = arith.addf %102, %104 : vector<1x128xf32>
    %106 = vector.broadcast %11 : f32 to vector<1x128xf32>
    %107 = arith.addf %105, %106 : vector<1x128xf32>
    %c0_9 = arith.constant 0 : index
    %c0_10 = arith.constant 0 : index
    %c0_11 = arith.constant 0 : index
    %108 = vector.load %arg3[%c0_9, %c0_10, %c0_11] : memref<3x1x128xf32, #tpu.memory_space<vmem>>, vector<1x1x128xf32>
    %109 = vector.shape_cast %108 : vector<1x1x128xf32> to vector<1x128xf32>
    %110 = vector.shape_cast %87 : vector<1x128xf32> to vector<1x1x128xf32>
    tpu.vector_store %arg3[%c0_9, %c0_10, %c0_11], %110 {strides = array<i32>} : memref<3x1x128xf32, #tpu.memory_space<vmem>>, vector<1x1x128xf32>,
    %c1_12 = arith.constant 1 : index
    %c0_13 = arith.constant 0 : index
    %c0_14 = arith.constant 0 : index
    %111 = vector.load %arg3[%c1_12, %c0_13, %c0_14] : memref<3x1x128xf32, #tpu.memory_space<vmem>>, vector<1x1x128xf32>
    %112 = vector.shape_cast %111 : vector<1x1x128xf32> to vector<1x128xf32>
    %113 = vector.shape_cast %97 : vector<1x128xf32> to vector<1x1x128xf32>
    tpu.vector_store %arg3[%c1_12, %c0_13, %c0_14], %113 {strides = array<i32>} : memref<3x1x128xf32, #tpu.memory_space<vmem>>, vector<1x1x128xf32>,
    %c2_15 = arith.constant 2 : index
    %c0_16 = arith.constant 0 : index
    %c0_17 = arith.constant 0 : index
    %114 = vector.load %arg3[%c2_15, %c0_16, %c0_17] : memref<3x1x128xf32, #tpu.memory_space<vmem>>, vector<1x1x128xf32>
    %115 = vector.shape_cast %114 : vector<1x1x128xf32> to vector<1x128xf32>
    %116 = vector.shape_cast %107 : vector<1x128xf32> to vector<1x1x128xf32>
    tpu.vector_store %arg3[%c2_15, %c0_16, %c0_17], %116 {strides = array<i32>} : memref<3x1x128xf32, #tpu.memory_space<vmem>>, vector<1x1x128xf32>,
    return
  }
  func.func @transform_0(%arg0: i32) -> i32 {
    %c0_i32 = arith.constant 0 : i32
    %c0_i32_0 = arith.constant 0 : i32
    return %c0_i32 : i32
  }
  func.func @transform_1(%arg0: i32) -> (i32, i32, i32) {
    %c0_i32 = arith.constant 0 : i32
    %c0_i32_0 = arith.constant 0 : i32
    %c0_i32_1 = arith.constant 0 : i32
    return %c0_i32, %arg0, %c0_i32_0 : i32, i32, i32
  }
  func.func @transform_2(%arg0: i32) -> (i32, i32, i32) {
    %c0_i32 = arith.constant 0 : i32
    %c0_i32_0 = arith.constant 0 : i32
    %c0_i32_1 = arith.constant 0 : i32
    return %c0_i32, %arg0, %c0_i32_0 : i32, i32, i32
  }
}

</mosaic_0001>

<llo_original>
// kernel: tpu_custom_call.1
$region0: #{tpu_custom_call.1}
  #allocation0 [shape = 'u32[]', space=smem, size = 0x4, offset = 0x4, fixed_abs, tag = 'smem constant byte address 0x4 - core index']
  #allocation1 [shape = 'u32[72,128]{1,0:T(1,128)}', space=vmem, size = 0x9000, scoped, tag = 'internal scratch']
  %s0 = inlined_call_operand.hbm [shape: f32[12], index: 0, kind: input, shape index: {}]
  %s1 = inlined_call_operand.hbm [shape: f32[3,1,128], index: 1, kind: input, shape index: {}]
  %s2 = inlined_call_operand.hbm [shape: f32[3,1,128], index: 2, kind: output, shape index: {}]
  %s3 = sld [smem:[#allocation0]]
  $region26: #{tpu_custom_call.1} parent=0
    _
  %s5 = ssub.s32 1, %s3
  %s6 = scalar_select 0, %s5, %s3
  $region1: #{tpu_custom_call.1} parent=0
    #allocation2 [shape = 'u8[512]{0}', space=smem, size = 0x200, scoped, tag = 'input window, operand 0, single buffered']
    #allocation3 [shape = 's32[1]{0}', space=sflag, size = 0x4, scoped, tag = 'scoped memory for tpu_custom_call.1']
    #allocation4 [shape = 's32[1]{0}', space=sflag, size = 0x4, scoped, tag = 'scoped memory for tpu_custom_call.1']
    #allocation5 [shape = 's32[1]{0}', space=sflag, size = 0x4, scoped, tag = 'scoped memory for tpu_custom_call.1']
    #allocation6 [shape = 'u8[1536]{0}', space=vmem, size = 0x800, scoped, tag = 'input window, operand 1, single buffered']
    #allocation7 [shape = 'u8[1536]{0}', space=vmem, size = 0x800, scoped, tag = 'output window, operand 0, single buffered']
    %7 = vsyncpa [#allocation5], 0
    %8 = vsyncpa [#allocation3], 0
    %9 = vsyncpa [#allocation4], 0
    // Predicated region
    $region2: #{tpu_custom_call.1} parent=1 // pred_check
      _
    $region3: #{tpu_custom_call.1} parent=1 // pred_check_branch
      %11 = sbr.rel (0) target = $region5
    $region4: #{tpu_custom_call.1} parent=1 // pred_region
      %13 = vsyncadd [#allocation5], 0
      %s15 = sshll.u32 %s0, 4
      %s16 = int_to_ptr.hbm [resolvable:$true] %s15
      %18 = dma.hbm_to_smem %s16, 16, [#allocation2], [#allocation5]
    $region5: #{tpu_custom_call.1} parent=1 // pred_fallthru
      _
    // Predicated region
    $region6: #{tpu_custom_call.1} parent=1 // pred_check
      _
    $region7: #{tpu_custom_call.1} parent=1 // pred_check_branch
      %20 = sbr.rel (0) target = $region9
    $region8: #{tpu_custom_call.1} parent=1 // pred_region
      %22 = vsyncadd [#allocation3], 0
      %s23 = sshll.u32 %s1, 4
      %s24 = int_to_ptr.hbm [resolvable:$true] %s23
      %s25 = sshll.u32 [#allocation6], 4
      %s26 = int_to_ptr.vmem [resolvable:$true] %s25
      %31 = dma.hbm_to_vmem [thread:$0]  %s24, 48, %s26, [#allocation3], 16, 16, 1
    $region9: #{tpu_custom_call.1} parent=1 // pred_fallthru
      _
    // Predicated region
    $region10: #{tpu_custom_call.1} parent=1 // pred_check
      _
    $region11: #{tpu_custom_call.1} parent=1 // pred_check_branch
      %33 = sbr.rel (0) target = $region13
    $region12: #{tpu_custom_call.1} parent=1 // pred_region
      %35 = dma.done [#allocation5], 16
    $region13: #{tpu_custom_call.1} parent=1 // pred_fallthru
      _
    // Predicated region
    $region14: #{tpu_custom_call.1} parent=1 // pred_check
      _
    $region15: #{tpu_custom_call.1} parent=1 // pred_check_branch
      %37 = sbr.rel (0) target = $region17
    $region16: #{tpu_custom_call.1} parent=1 // pred_region
      %39 = dma.done [#allocation3], 48
    $region17: #{tpu_custom_call.1} parent=1 // pred_fallthru
      _
    %40 = sfence
    %s41 = sld [smem:[#allocation2]]
    %s42 = sld [smem:[#allocation2 + $0x1]]
    %s43 = sld [smem:[#allocation2 + $0x2]]
    %s44 = sld [smem:[#allocation2 + $0x3]]
    %s45 = sld [smem:[#allocation2 + $0x4]]
    %s46 = sld [smem:[#allocation2 + $0x5]]
    %s47 = sld [smem:[#allocation2 + $0x6]]
    %s48 = sld [smem:[#allocation2 + $0x7]]
    %s49 = sld [smem:[#allocation2 + $0x8]]
    %s50 = sld [smem:[#allocation2 + $0x9]]
    %s51 = sld [smem:[#allocation2 + $0xa]]
    %s52 = sld [smem:[#allocation2 + $0xb]]
    %v53 = vld [vmem:[#allocation6] sm:$0x1]
    %s54 = scalar_lea.vmem [#allocation6], 1
    %v55 = vld [vmem:[%s54] sm:$0x1]
    %s56 = scalar_lea.vmem [#allocation6], 2
    %v57 = vld [vmem:[%s56] sm:$0x1]
    %v58 = vstv %s41
    %v59 = vmul.f32 %v58, %v53
    %v60 = vstv %s42
    %v61 = vmul.f32 %v60, %v55
    %v62 = vadd.f32 %v59, %v61
    %v63 = vstv %s43
    %v64 = vmul.f32 %v63, %v57
    %v65 = vadd.f32 %v62, %v64
    %v66 = vstv %s50
    %v67 = vadd.f32 %v65, %v66
    %v68 = vstv %s44
    %v69 = vmul.f32 %v68, %v53
    %v70 = vstv %s45
    %v71 = vmul.f32 %v70, %v55
    %v72 = vadd.f32 %v69, %v71
    %v73 = vstv %s46
    %v74 = vmul.f32 %v73, %v57
    %v75 = vadd.f32 %v72, %v74
    %v76 = vstv %s51
    %v77 = vadd.f32 %v75, %v76
    %v78 = vstv %s47
    %v79 = vmul.f32 %v78, %v53
    %v80 = vstv %s48
    %v81 = vmul.f32 %v80, %v55
    %v82 = vadd.f32 %v79, %v81
    %v83 = vstv %s49
    %v84 = vmul.f32 %v83, %v57
    %v85 = vadd.f32 %v82, %v84
    %v86 = vstv %s52
    %v87 = vadd.f32 %v85, %v86
    %v88 = vmul.f32 %v58, %v67
    %v89 = vmul.f32 %v60, %v77
    %v90 = vadd.f32 %v88, %v89
    %v91 = vmul.f32 %v63, %v87
    %v92 = vadd.f32 %v90, %v91
    %v93 = vadd.f32 %v92, %v66
    %v94 = vmul.f32 %v68, %v67
    %v95 = vmul.f32 %v70, %v77
    %v96 = vadd.f32 %v94, %v95
    %v97 = vmul.f32 %v73, %v87
    %v98 = vadd.f32 %v96, %v97
    %v99 = vadd.f32 %v98, %v76
    %v100 = vmul.f32 %v78, %v67
    %v101 = vmul.f32 %v80, %v77
    %v102 = vadd.f32 %v100, %v101
    %v103 = vmul.f32 %v83, %v87
    %v104 = vadd.f32 %v102, %v103
    %v105 = vadd.f32 %v104, %v86
    %v106 = vmul.f32 %v58, %v93
    %v107 = vmul.f32 %v60, %v99
    %v108 = vadd.f32 %v106, %v107
    %v109 = vmul.f32 %v63, %v105
    %v110 = vadd.f32 %v108, %v109
    %v111 = vadd.f32 %v110, %v66
    %v112 = vmul.f32 %v68, %v93
    %v113 = vmul.f32 %v70, %v99
    %v114 = vadd.f32 %v112, %v113
    %v115 = vmul.f32 %v73, %v105
    %v116 = vadd.f32 %v114, %v115
    %v117 = vadd.f32 %v116, %v76
    %v118 = vmul.f32 %v78, %v93
    %v119 = vmul.f32 %v80, %v99
    %v120 = vadd.f32 %v118, %v119
    %v121 = vmul.f32 %v83, %v105
    %v122 = vadd.f32 %v120, %v121
    %v123 = vadd.f32 %v122, %v86
    %124 = vst [vmem:[#allocation7] sm:$0x1] %v111
    %s125 = scalar_lea.vmem [#allocation7], 1
    %126 = vst [vmem:[%s125] sm:$0x1] %v117
    %s127 = scalar_lea.vmem [#allocation7], 2
    %128 = vst [vmem:[%s127] sm:$0x1] %v123
    // Predicated region
    $region18: #{tpu_custom_call.1} parent=1 // pred_check
      _
    $region19: #{tpu_custom_call.1} parent=1 // pred_check_branch
      %130 = sbr.rel (0) target = $region21
    $region20: #{tpu_custom_call.1} parent=1 // pred_region
      %132 = vsyncadd [#allocation4], 0
      %s133 = sshll.u32 [#allocation7], 4
      %s134 = int_to_ptr.vmem [resolvable:$true] %s133
      %s135 = sshll.u32 %s2, 4
      %s136 = int_to_ptr.hbm [resolvable:$true] %s135
      %141 = dma.vmem_to_hbm [thread:$0]  %s134, 48, %s136, [#allocation4], 16, 16, 1
    $region21: #{tpu_custom_call.1} parent=1 // pred_fallthru
      _
    // Predicated region
    $region22: #{tpu_custom_call.1} parent=1 // pred_check
      _
    $region23: #{tpu_custom_call.1} parent=1 // pred_check_branch
      %143 = sbr.rel (0) target = $region25
    $region24: #{tpu_custom_call.1} parent=1 // pred_region
      %145 = dma.done [#allocation4], 48
    $region25: #{tpu_custom_call.1} parent=1 // pred_fallthru
      _
    %146 = vsyncpa [#allocation3], 1
    %147 = vsyncpa [#allocation4], 1
    %148 = vsyncpa [#allocation5], 1

</llo_original>
